<compile_context>
chip_gen: v6e
topology: v6e:2x2x1
jax: 0.10.0
libtpu: 0.0.40
codegen_flags: <defaults>
</compile_context>

<pallas_src>
import functools

import jax
import jax.numpy as jnp
from jax import lax
from jax.experimental import pallas as pl
from jax.experimental.pallas import tpu as pltpu

_LANES = 128
_SUBLANES = 8


def _device_kind():
    try:
        return jax.devices()[0].device_kind.lower()
    except Exception:
        return ""


def _default_core_splits():
    # v7x has 2 TensorCores per chip visible to one kernel; v5e/v6e have 1,
    # where a 2-way split is just a wasted serial outer loop (plus phantom
    # tiles / masking when num_tiles is odd).
    return 2 if "v7" in _device_kind() else 1


def _dim_semantics(splits):
    if splits >= 2 and "v7" in _device_kind():
        core_par = getattr(pltpu, "CORE_PARALLEL", None)
        if core_par is not None:
            # Guarantees the leading axis is sharded across the 2 TCs.
            return (core_par, "arbitrary")
    return ("parallel", "arbitrary")


def _ssq_kernel(x_ref, o_ref, *, tiles_per_core, tile_rows, acc_rows,
                num_tiles, valid_rows, has_phantom, has_ragged):
    c = pl.program_id(0)          # core split (parallel / core_parallel)
    i = pl.program_id(1)          # streaming tile within this core
    tile_idx = c * tiles_per_core + i

    @pl.when(i == 0)
    def _():
        o_ref[...] = jnp.zeros_like(o_ref)

    def squared():
        xf = x_ref[...].astype(jnp.float32)
        return xf * xf

    def accumulate(xsq):
        # Fold the (tile_rows, 128) block into the resident (1, acc_rows, 128)
        # accumulator with vreg-aligned VPU adds (acc_rows/8 independent
        # accumulator vregs -> short dependency chains, no XLU work).
        o_ref[...] += jnp.sum(xsq.reshape(-1, acc_rows, _LANES), axis=0)[None]

    if not has_phantom and not has_ragged:
        # Hot path: square + add only (2 VALU ops per vreg), fully mem-bound.
        accumulate(squared())
        return

    is_last = tile_idx == num_tiles - 1

    if has_phantom:
        stream_pred = tile_idx < num_tiles
        if has_ragged:
            stream_pred = jnp.logical_and(stream_pred,
                                          jnp.logical_not(is_last))
    else:
        stream_pred = jnp.logical_not(is_last)

    # Unmasked streaming path for every full, real tile.
    @pl.when(stream_pred)
    def _():
        accumulate(squared())

    if has_ragged:
        # Only the single edge-ragged last tile pays for the iota/cmp/select.
        @pl.when(is_last)
        def _():
            row_ids = tile_idx * tile_rows + lax.broadcasted_iota(
                jnp.int32, (tile_rows, _LANES), 0)
            accumulate(jnp.where(row_ids < valid_rows, squared(), 0.0))


def mean_squared_l2_norm(x, *, tile_rows=16384, num_core_splits=None):
    """Pallas implementation of torch.mean(torch.sum(x**2, dim=1))."""
    if x.ndim < 2:
        raise ValueError("input must have at least 2 dims (N, C, ...)")
    channels = x.shape[1]
    numel = x.size
    inv_count = channels / numel  # == 1 / (#elements reduced by the mean)

    itemsize = jnp.dtype(x.dtype).itemsize
    # Min sublane multiple per dtype: 8 (f32), 16 (bf16), 32 (int8/fp8).
    sub_mult = max(_SUBLANES, 32 // max(itemsize, 1))

    # Lane-dense 2D view of the flattened tensor.  Reshape of a contiguous
    # array is free; the edge-ragged last block is masked in-kernel, so no
    # padding is needed when numel is a multiple of 128 (the common case).
    flat = x.reshape(-1)
    min_elems = sub_mult * _LANES
    if numel % _LANES != 0 or numel < min_elems:
        # TODO(synk): rare fallback (non-128-multiple or tiny tensors) pads
        # via jnp.pad, which copies the whole tensor in HBM; keep awkward
        # shapes out of the hot path if that ever matters.
        padded = max(min_elems, pl.cdiv(numel, _LANES) * _LANES)
        flat = jnp.pad(flat, (0, padded - numel))
    x2d = flat.reshape(-1, _LANES)
    rows = x2d.shape[0]

    # Tile sizing: big streaming blocks, clamped to the array and rounded to
    # the dtype's sublane multiple.
    tr = min(tile_rows, rows)
    tr = max(sub_mult, (tr // sub_mult) * sub_mult)
    num_tiles = pl.cdiv(rows, tr)

    # Core split (2-way only when 2 TensorCores actually exist).
    splits = _default_core_splits() if num_core_splits is None else num_core_splits
    splits = max(1, min(splits, num_tiles))
    tiles_per_core = pl.cdiv(num_tiles, splits)
    has_phantom = splits * tiles_per_core != num_tiles   # grid overshoot
    has_ragged = num_tiles * tr != rows                  # last tile partial

    # Accumulator width: up to 8 vregs (64 rows), must divide the tile.
    acc_rows = _SUBLANES
    for cand in (64, 32, 16):
        if tr % cand == 0:
            acc_rows = cand
            break

    if has_phantom:
        # Clamp phantom tiles onto the last real block; the kernel skips
        # their accumulation entirely via pl.when.
        in_map = lambda c, i: (jnp.minimum(c * tiles_per_core + i,
                                           num_tiles - 1), 0)
    else:
        in_map = lambda c, i: (c * tiles_per_core + i, 0)

    kernel = functools.partial(
        _ssq_kernel,
        tiles_per_core=tiles_per_core,
        tile_rows=tr,
        acc_rows=acc_rows,
        num_tiles=num_tiles,
        valid_rows=rows,
        has_phantom=has_phantom,
        has_ragged=has_ragged,
    )

    # Enough scoped VMEM for double-buffered input blocks + tiny output,
    # with headroom; floor at 32 MiB (v5e's default is only 16 MiB).
    block_bytes = tr * _LANES * itemsize
    vmem_limit = int(min(56 << 20, max(32 << 20, 3 * block_bytes + (8 << 20))))

    partials = pl.pallas_call(
        kernel,
        out_shape=jax.ShapeDtypeStruct((splits, acc_rows, _LANES),
                                       jnp.float32),
        grid_spec=pltpu.PrefetchScalarGridSpec(
            num_scalar_prefetch=0,
            grid=(splits, tiles_per_core),
            in_specs=[pl.BlockSpec((tr, _LANES), in_map)],
            out_specs=pl.BlockSpec((1, acc_rows, _LANES),
                                   lambda c, i: (c, 0, 0)),
        ),
        compiler_params=pltpu.CompilerParams(
            dimension_semantics=_dim_semantics(splits),
            vmem_limit_bytes=vmem_limit),
    )(x2d)

    # Single tiny cross-lane reduce + mean scale outside the hot loop.
    return jnp.sum(partials) * jnp.float32(inv_count)


def _reference(x):
    return jnp.mean(jnp.sum(x.astype(jnp.float32) ** 2, axis=1))


def _check(name, got, want, rtol=1e-5, atol=1e-5):
    assert jnp.allclose(got, want, rtol=rtol, atol=atol), (name, got, want)


if __name__ == "__main__":
    key = jax.random.PRNGKey(0)
    k0, k1, k2, k3, k4 = jax.random.split(key, 5)

    # Primary case (matches the module's expected NCHW usage).
    x = jax.random.normal(k0, (2, 4, 16, 16), dtype=jnp.float32)
    loss = jax.block_until_ready(mean_squared_l2_norm(x))
    _check("primary", loss, _reference(x))

    # Forced dual-core split: exercises phantom-tile skip + clamped index_map.
    x2 = jax.random.normal(k1, (3, 4, 16, 16), dtype=jnp.float32)
    loss2 = jax.block_until_ready(
        mean_squared_l2_norm(x2, tile_rows=8, num_core_splits=2))
    _check("split", loss2, _reference(x2))

    # Awkward shape (numel not a multiple of 128): rare pad fallback.
    x3 = jax.random.normal(k2, (2, 3, 5, 7), dtype=jnp.float32)
    loss3 = jax.block_until_ready(mean_squared_l2_norm(x3))
    _check("padded", loss3, _reference(x3))

    # Ragged last tile (rows % tile_rows != 0): edge-partial block + row mask.
    x4 = jax.random.normal(k3, (5, 4, 16, 16), dtype=jnp.float32)
    loss4 = jax.block_until_ready(
        mean_squared_l2_norm(x4, tile_rows=16, num_core_splits=1))
    _check("ragged", loss4, _reference(x4))

    # bf16 input: dtype-aware sublane rounding, f32 accumulation.
    x5 = jax.random.normal(k4, (2, 8, 16, 16), dtype=jnp.float32).astype(
        jnp.bfloat16)
    loss5 = jax.block_until_ready(mean_squared_l2_norm(x5))
    _check("bf16", loss5, _reference(x5), rtol=1e-3, atol=1e-3)

    print("KERNEL_OK")
</pallas_src>

<mosaic_0001>
module attributes {stable_mosaic.version = 11 : i64} {
  func.func @_ssq_kernel(%arg0: i32, %arg1: i32, %arg2: memref<16x128xf32, #tpu.memory_space<vmem>>, %arg3: memref<1x16x128xf32, #tpu.memory_space<vmem>>) attributes {dimension_semantics = [#tpu.dimension_semantics<parallel>, #tpu.dimension_semantics<arbitrary>], iteration_bounds = array<i64: 1, 1>, scalar_prefetch = 0 : i64, scratch_operands = 0 : i64, tpu.core_type = #tpu.core_type<tc>, window_params = [{transform_indices = @transform_0, window_bounds = array<i64: 16, 128>}, {transform_indices = @transform_1, window_bounds = array<i64: 1, 16, 128>}]} {
    %c0_i32 = arith.constant 0 : i32
    %0 = arith.cmpi eq, %arg1, %c0_i32 : i32
    %1 = arith.extui %0 : i1 to i32
    %c0_i32_0 = arith.constant 0 : i32
    %2 = arith.cmpi ne, %1, %c0_i32_0 : i32
    scf.if %2 {
      %cst_8 = arith.constant 0.000000e+00 : f32
      %11 = vector.broadcast %cst_8 : f32 to vector<1x16x128xf32>
      %c0_9 = arith.constant 0 : index
      %c0_10 = arith.constant 0 : index
      %c0_11 = arith.constant 0 : index
      %12 = vector.load %arg3[%c0_9, %c0_10, %c0_11] : memref<1x16x128xf32, #tpu.memory_space<vmem>>, vector<1x16x128xf32>
      tpu.vector_store %arg3[%c0_9, %c0_10, %c0_11], %11 {strides = array<i32>} : memref<1x16x128xf32, #tpu.memory_space<vmem>>, vector<1x16x128xf32>,
    } else {
    }
    %c0 = arith.constant 0 : index
    %c0_1 = arith.constant 0 : index
    %3 = vector.load %arg2[%c0, %c0_1] : memref<16x128xf32, #tpu.memory_space<vmem>>, vector<16x128xf32>
    %4 = arith.mulf %3, %3 : vector<16x128xf32>
    %c0_2 = arith.constant 0 : index
    %c0_3 = arith.constant 0 : index
    %c0_4 = arith.constant 0 : index
    %5 = vector.load %arg3[%c0_2, %c0_3, %c0_4] : memref<1x16x128xf32, #tpu.memory_space<vmem>>, vector<1x16x128xf32>
    %6 = vector.shape_cast %4 : vector<16x128xf32> to vector<1x16x128xf32>
    %cst = arith.constant dense<0.000000e+00> : vector<16x128xf32>
    %7 = vector.multi_reduction <add>, %6, %cst [0] : vector<1x16x128xf32> to vector<16x128xf32>
    %8 = vector.shape_cast %7 : vector<16x128xf32> to vector<1x16x128xf32>
    %9 = arith.addf %5, %8 : vector<1x16x128xf32>
    %c0_5 = arith.constant 0 : index
    %c0_6 = arith.constant 0 : index
    %c0_7 = arith.constant 0 : index
    %10 = vector.load %arg3[%c0_5, %c0_6, %c0_7] : memref<1x16x128xf32, #tpu.memory_space<vmem>>, vector<1x16x128xf32>
    tpu.vector_store %arg3[%c0_5, %c0_6, %c0_7], %9 {strides = array<i32>} : memref<1x16x128xf32, #tpu.memory_space<vmem>>, vector<1x16x128xf32>,
    return
  }
  func.func @transform_0(%arg0: i32, %arg1: i32) -> (i32, i32) {
    %c1_i32 = arith.constant 1 : i32
    %0 = arith.muli %arg0, %c1_i32 : i32
    %1 = arith.addi %0, %arg1 : i32
    %c0_i32 = arith.constant 0 : i32
    %c0_i32_0 = arith.constant 0 : i32
    return %1, %c0_i32 : i32, i32
  }
  func.func @transform_1(%arg0: i32, %arg1: i32) -> (i32, i32, i32) {
    %c0_i32 = arith.constant 0 : i32
    %c0_i32_0 = arith.constant 0 : i32
    %c0_i32_1 = arith.constant 0 : i32
    return %arg0, %c0_i32, %c0_i32_0 : i32, i32, i32
  }
}

</mosaic_0001>

<llo_original>
// kernel: tpu_custom_call.1
$region0: #{tpu_custom_call.1}
  #allocation0 [shape = 'u32[]', space=smem, size = 0x4, offset = 0x4, fixed_abs, tag = 'smem constant byte address 0x4 - core index']
  #allocation1 [shape = 'u32[144,128]{1,0:T(1,128)}', space=vmem, size = 0x12000, scoped, tag = 'internal scratch']
  %s0 = inlined_call_operand.hbm [shape: f32[16,128], index: 0, kind: input, shape index: {}]
  %s1 = inlined_call_operand.hbm [shape: f32[1,16,128], index: 1, kind: output, shape index: {}]
  %s2 = sld [smem:[#allocation0]]
  $region22: #{tpu_custom_call.1} parent=0
    _
  %s4 = ssub.s32 1, %s2
  %s5 = scalar_select 0, %s4, %s2
  $region1: #{tpu_custom_call.1} parent=0
    #allocation2 [shape = 'u8[8192]{0}', space=vmem, size = 0x2000, scoped, tag = 'input window, operand 0, single buffered']
    #allocation3 [shape = 's32[1]{0}', space=sflag, size = 0x4, scoped, tag = 'scoped memory for tpu_custom_call.1']
    #allocation4 [shape = 's32[1]{0}', space=sflag, size = 0x4, scoped, tag = 'scoped memory for tpu_custom_call.1']
    #allocation5 [shape = 'u8[8192]{0}', space=vmem, size = 0x2000, scoped, tag = 'output window, operand 0, single buffered']
    %6 = vsyncpa [#allocation3], 0
    %7 = vsyncpa [#allocation4], 0
    // Predicated region
    $region2: #{tpu_custom_call.1} parent=1 // pred_check
      _
    $region3: #{tpu_custom_call.1} parent=1 // pred_check_branch
      %9 = sbr.rel (0) target = $region5
    $region4: #{tpu_custom_call.1} parent=1 // pred_region
      %s10 = sadd.s32 0, 0
      %s11 = smul.u32 2, %s10
      %s13 = ssub.s32 256, 256
      %14 = vsyncadd [#allocation3], %s13
      %s15 = smul.addr %s11, 128
      %s16 = scalar_lea.hbm %s0, %s15
      %s17 = sshll.u32 [#allocation2], 4
      %s18 = int_to_ptr.vmem [resolvable:$true] %s17
      %23 = dma.hbm_to_vmem [thread:$0]  %s16, 256, %s18, [#allocation3], 128, 128, 8
    $region5: #{tpu_custom_call.1} parent=1 // pred_fallthru
      _
    // Predicated region
    $region6: #{tpu_custom_call.1} parent=1 // pred_check
      _
    $region7: #{tpu_custom_call.1} parent=1 // pred_check_branch
      %25 = sbr.rel (0) target = $region9
    $region8: #{tpu_custom_call.1} parent=1 // pred_region
      %26 = dma.done [#allocation3], 256
    $region9: #{tpu_custom_call.1} parent=1 // pred_fallthru
      _
    %s27 = sadd.s32 0, 0
    %s28 = smul.u32 2, %s27
    %p29 = scmp.eq.s32.totalorder 0, 0
    // Predicated region
    $region10: #{tpu_custom_call.1} parent=1 // pred_check
      %p30 = pneg %p29
    $region11: #{tpu_custom_call.1} parent=1 // pred_check_branch
      %32 = sbr.rel (%p30) target = $region13
    $region12: #{tpu_custom_call.1} parent=1 // pred_region
      %33 = vst [vmem:[#allocation5] sm:$0xff] 0.0
      %34 = vst [vmem:[#allocation5 + $0x8] sm:$0xff] 0.0
    $region13: #{tpu_custom_call.1} parent=1 // pred_fallthru
      _
    %v35 = vld [vmem:[#allocation2] sm:$0xff]
    %v36 = vld [vmem:[#allocation2 + $0x8] sm:$0xff]
    %v37 = vmul.f32 %v35, %v35
    %v38 = vmul.f32 %v36, %v36
    %v39 = vld [vmem:[#allocation5] sm:$0xff]
    %v40 = vld [vmem:[#allocation5 + $0x8] sm:$0xff]
    %v41 = vadd.f32 %v37, 0.0
    %v42 = vadd.f32 %v38, 0.0
    %v43 = vadd.f32 %v39, %v41
    %v44 = vadd.f32 %v40, %v42
    %45 = vst [vmem:[#allocation5] sm:$0xff] %v43
    %46 = vst [vmem:[#allocation5 + $0x8] sm:$0xff] %v44
    // Predicated region
    $region14: #{tpu_custom_call.1} parent=1 // pred_check
      _
    $region15: #{tpu_custom_call.1} parent=1 // pred_check_branch
      %48 = sbr.rel (0) target = $region17
    $region16: #{tpu_custom_call.1} parent=1 // pred_region
      %s50 = ssub.s32 256, 256
      %51 = vsyncadd [#allocation4], %s50
      %s52 = sshll.u32 [#allocation5], 4
      %s53 = int_to_ptr.vmem [resolvable:$true] %s52
      %58 = dma.vmem_to_hbm [thread:$0]  %s53, 256, %s1, [#allocation4], 128, 128, 8
    $region17: #{tpu_custom_call.1} parent=1 // pred_fallthru
      _
    // Predicated region
    $region18: #{tpu_custom_call.1} parent=1 // pred_check
      _
    $region19: #{tpu_custom_call.1} parent=1 // pred_check_branch
      %60 = sbr.rel (0) target = $region21
    $region20: #{tpu_custom_call.1} parent=1 // pred_region
      %61 = dma.done [#allocation4], 256
    $region21: #{tpu_custom_call.1} parent=1 // pred_fallthru
      _
    %62 = vsyncpa [#allocation3], 1
    %63 = vsyncpa [#allocation4], 1

</llo_original>
